<compile_context>
chip_gen: v7x
topology: tpu7x:2x2x1
jax: 0.10.0
libtpu: 0.0.40
codegen_flags: <defaults>
</compile_context>

<pallas_src>
import functools

import jax
import jax.numpy as jnp
from jax.experimental import pallas as pl
from jax.experimental.pallas import tpu as pltpu

_LANE = 128
_SUB = 8
_NEG_BIG = -1.0e30  # padded-class / padded-t bias: never wins a max, exp -> 0


def _round_up(x, m):
    return ((x + m - 1) // m) * m


def _kernel(x_ref, wt_ref, bc_ref, wp_ref, bp_ref, o_ref, *, n_filters, t_group):
    """One batch tile, fully fused:
       Toeplitz conv matmul -> bias+ReLU -> transpose -> per-filter maxpool
       -> f32 projection FMAs -> log_softmax -> (C_pad8, bt) store."""
    # (bt, S*D) bf16 @ (S*D, FG_pad) bf16 -> f32: the whole conv in one MXU pass.
    x = x_ref[...].astype(jnp.bfloat16)
    y = jnp.dot(x, wt_ref[...], preferred_element_type=jnp.float32)
    # Conv bias + ReLU.  Padded-t / phantom-filter columns carry a -1e30 bias, so
    # they clamp to 0 and can never beat a valid maxpool entry (valid ReLU >= 0).
    y = jnp.maximum(y + bc_ref[...], 0.0)                     # (bt, FG_pad)

    # Transpose once so filters/classes live on sublanes and the batch on lanes:
    # pooling slices become sublane-aligned and the softmax exp only touches
    # 8 sublanes instead of 128 padded lanes.
    yt = jnp.transpose(y)                                     # (FG_pad, bt)

    wp = wp_ref[...]                                          # (C_pad8, F)
    logits = bp_ref[...]                                      # (C_pad8, 1) broadcasts up
    for f in range(n_filters):
        seg = yt[f * t_group:(f + 1) * t_group, :]            # (Tp, bt) sublane slice
        pooled = jnp.max(seg, axis=0, keepdims=True)          # (1, bt)  maxpool over t
        logits = logits + pooled * wp[:, f:f + 1]             # exact f32 FMA projection

    # Numerically stable log_softmax over the (sublane) class axis.  Padded class
    # rows hold a -1e30 bias -> exp underflows to 0 -> valid rows are unaffected.
    m = jnp.max(logits, axis=0, keepdims=True)
    z = logits - m
    lse = jnp.log(jnp.sum(jnp.exp(z), axis=0, keepdims=True))
    o_ref[...] = (z - lse).astype(o_ref.dtype)


def comment_wise_conv_log_softmax(x, w_conv, b_conv, w_proj, b_proj, *, block_b=2048):
    """x: (B, S, D); w_conv: (F, K, D) (Conv2d weight (F,1,K,D) squeezed);
    b_conv: (F,); w_proj: (C, F); b_proj: (C,).  Conv2d stride=1, padding=0
    (the module's hp defaults)."""
    B, S, D = x.shape
    F, K, _ = w_conv.shape
    C = w_proj.shape[0]
    T = S - K + 1                         # conv output length (stride=1, padding=0)
    SD = S * D
    Tp = _round_up(T, _SUB)               # per-filter pooling group (sublane aligned)
    FG = F * Tp
    FGp = _round_up(FG, _LANE)            # lane-padded conv-matmul output width
    C8 = _round_up(C, _SUB)               # class axis padded to one sublane tile

    # ---- parameter packing (tiny wrapper-side JAX; never touches x) ----
    # Block-Toeplitz conv weight: wt[s*D + d, f*Tp + t] = w_conv[f, s - t, d].
    s_idx = jnp.arange(S)[:, None]                               # (S, 1)
    t_idx = jnp.arange(Tp)[None, :]                              # (1, Tp)
    k_val = s_idx - t_idx                                        # (S, Tp)
    valid = (k_val >= 0) & (k_val < K) & (t_idx < T)
    wk = w_conv.astype(jnp.float32)[:, jnp.clip(k_val, 0, K - 1), :]   # (F, S, Tp, D)
    wt = jnp.where(valid[None, :, :, None], wk, 0.0)
    wt = jnp.transpose(wt, (1, 3, 0, 2)).reshape(SD, FG)         # rows s*D+d, cols f*Tp+t
    wt = jnp.pad(wt, ((0, 0), (0, FGp - FG))).astype(jnp.bfloat16)
    # Conv bias (f-major); padded t positions / phantom filters get -1e30.
    bc = jnp.where(t_idx < T, b_conv.astype(jnp.float32)[:, None], _NEG_BIG)  # (F, Tp)
    bc = jnp.pad(bc.reshape(1, FG), ((0, 0), (0, FGp - FG)),
                 constant_values=_NEG_BIG)
    # Projection weight / bias with the class axis padded to 8 sublanes.
    wp = jnp.zeros((C8, F), jnp.float32).at[:C, :].set(w_proj.astype(jnp.float32))
    bp = jnp.full((C8, 1), _NEG_BIG, jnp.float32).at[:C, 0].set(
        b_proj.astype(jnp.float32))

    # ---- batch handling: no full-HBM cast/pad passes over x ----
    x2 = x.reshape(B, SD)                 # contiguous collapse, no data movement
    b_rows = B
    if b_rows < _LANE:
        # Tiny batches: one cheap pad (a few KB) so every in-kernel shape stays
        # (multiple-of-128)-clean; large batches are never padded or copied.
        x2 = jnp.pad(x2, ((0, _LANE - b_rows), (0, 0)))
        b_rows = _LANE

    # ---- batch tile selection ----
    block_b = max(_LANE, _round_up(block_b, _LANE))
    # Cap the tile so the double-buffered working set stays well inside v7x's
    # 64 MiB physical VMEM (v5e/v6e have 128 MiB); the 32 MiB scoped limit below
    # also raises v5e's 16 MiB default so the big tile is actually usable there.
    bytes_per_row = (2 * SD * x.dtype.itemsize       # double-buffered input tile
                     + 2 * SD                        # in-kernel bf16 copy
                     + 4 * FGp * 4                   # y / y^T f32 intermediates
                     + 4 * C8 * 4)                   # logits + 2x output buffers
    bt_cap = max(_LANE, (24 * 1024 * 1024 // bytes_per_row) // _LANE * _LANE)
    block_b = min(block_b, bt_cap)

    n_steps = pl.cdiv(b_rows, block_b)
    if n_steps == 1 and b_rows >= 2 * _LANE:
        n_steps = 2                       # >=2 grid steps so both cores get work
    bt = _round_up(pl.cdiv(b_rows, n_steps), _LANE)
    n_grid = pl.cdiv(b_rows, bt)
    b_cols = n_grid * bt                  # output padded to whole tiles -> unmasked stores

    cost = pl.CostEstimate(
        flops=int(2 * b_cols * SD * FGp + 2 * b_cols * F * C8),
        transcendentals=int(b_cols * C8),
        bytes_accessed=int(b_cols * SD * x.dtype.itemsize + SD * FGp * 2 + FGp * 4
                           + C8 * F * 4 + C8 * 4 + C8 * b_cols * 4),
    )

    out = pl.pallas_call(
        functools.partial(_kernel, n_filters=F, t_group=Tp),
        out_shape=jax.ShapeDtypeStruct((C8, b_cols), jnp.float32),
        grid=(n_grid,),
        in_specs=[
            pl.BlockSpec((bt, SD), lambda i: (i, 0)),    # batch tile (ragged tail ok)
            pl.BlockSpec((SD, FGp), lambda i: (0, 0)),   # Toeplitz conv weight (resident)
            pl.BlockSpec((1, FGp), lambda i: (0, 0)),    # conv bias (+ -1e30 pads)
            pl.BlockSpec((C8, F), lambda i: (0, 0)),     # projection weight
            pl.BlockSpec((C8, 1), lambda i: (0, 0)),     # projection bias (+ -1e30 pads)
        ],
        out_specs=pl.BlockSpec((C8, bt), lambda i: (0, i)),
        compiler_params=pltpu.CompilerParams(
            dimension_semantics=("parallel",),
            vmem_limit_bytes=32 * 1024 * 1024),
        cost_estimate=cost,
    )(x2, wt, bc, wp, bp)

    # (C8, b_cols) -> (B, C): pad rows/cols carry garbage and are dropped here.
    return out[:C, :B].T


def _reference(x, w_conv, b_conv, w_proj, b_proj):
    """Plain-JAX reference matching the PyTorch forward (eval mode)."""
    B, S, D = x.shape
    F, K, _ = w_conv.shape
    T = S - K + 1
    patches = jnp.stack([x[:, k:k + T, :] for k in range(K)], axis=2)   # (B, T, K, D)
    y = jnp.einsum('btkd,fkd->btf', patches, w_conv,
                   precision=jax.lax.Precision.HIGHEST) + b_conv        # conv
    y = jnp.maximum(y, 0.0)                                             # relu
    pooled = jnp.max(y, axis=1)                                         # maxpool
    logits = jnp.dot(pooled, w_proj.T,
                     precision=jax.lax.Precision.HIGHEST) + b_proj      # linear
    return jax.nn.log_softmax(logits, axis=-1)


if __name__ == "__main__":
    # hp-consistent small shapes: clip_comments_to=16, model_size=32,
    # output_conv_kernel_size=3, output_conv_num_filters=8,
    # output_conv_stride=1, output_conv_padding=0, output_size=4.
    S, D, K, F, C = 16, 32, 3, 8, 4

    key = jax.random.PRNGKey(0)
    kx, kw, kb, kpw, kpb = jax.random.split(key, 5)
    w_conv = 0.1 * jax.random.normal(kw, (F, K, D), dtype=jnp.float32)   # Conv2d (F,1,K,D) squeezed
    b_conv = 0.1 * jax.random.normal(kb, (F,), dtype=jnp.float32)
    w_proj = 0.1 * jax.random.normal(kpw, (C, F), dtype=jnp.float32)     # Linear weight (out, in)
    b_proj = 0.1 * jax.random.normal(kpb, (C,), dtype=jnp.float32)

    # (20, 2048): tiny batch -> single 128-row tile.
    # (300, 2048): auto-split into 2 tiles of 256 rows (megacore) with a ragged tail.
    # (300, 128):  forced small tiles -> 3 grid steps, ragged last block.
    for batch, blk in ((20, 2048), (300, 2048), (300, 128)):
        x = jax.random.normal(jax.random.fold_in(kx, batch), (batch, S, D),
                              dtype=jnp.float32)
        out = comment_wise_conv_log_softmax(x, w_conv, b_conv, w_proj, b_proj,
                                            block_b=blk)
        out = jax.block_until_ready(out)

        # Reference consumes the same bf16-quantized x / conv weight the kernel uses.
        ref = _reference(x.astype(jnp.bfloat16).astype(jnp.float32),
                         w_conv.astype(jnp.bfloat16).astype(jnp.float32),
                         b_conv, w_proj, b_proj)
        assert out.shape == (batch, C), out.shape
        assert jnp.allclose(out, ref, atol=1e-3, rtol=1e-3), (
            float(jnp.max(jnp.abs(out - ref))))

    # TODO(synk): training-mode dropout (hp.last_layer_dropout) and
    # output_conv_stride/padding other than (1, 0) are not implemented; this is the
    # eval-mode forward with the module's default conv hyper-parameters.
    print("KERNEL_OK")
</pallas_src>

<mosaic_0001>
module attributes {stable_mosaic.version = 11 : i64} {
  func.func @_kernel(%arg0: i32, %arg1: memref<128x512xf32, #tpu.memory_space<vmem>>, %arg2: memref<512x128xbf16, #tpu.memory_space<vmem>>, %arg3: memref<1x128xf32, #tpu.memory_space<vmem>>, %arg4: memref<8x8xf32, #tpu.memory_space<vmem>>, %arg5: memref<8x1xf32, #tpu.memory_space<vmem>>, %arg6: memref<8x128xf32, #tpu.memory_space<vmem>>) attributes {dimension_semantics = [#tpu.dimension_semantics<parallel>], iteration_bounds = array<i64: 1>, scalar_prefetch = 0 : i64, scratch_operands = 0 : i64, tpu.core_type = #tpu.core_type<tc>, window_params = [{transform_indices = @transform_0, window_bounds = array<i64: 128, 512>}, {pipeline_mode = #tpu.pipeline_mode<synchronous>, transform_indices = @transform_1, window_bounds = array<i64: 512, 128>}, {pipeline_mode = #tpu.pipeline_mode<synchronous>, transform_indices = @transform_2, window_bounds = array<i64: 1, 128>}, {pipeline_mode = #tpu.pipeline_mode<synchronous>, transform_indices = @transform_3, window_bounds = array<i64: 8, 8>}, {pipeline_mode = #tpu.pipeline_mode<synchronous>, transform_indices = @transform_4, window_bounds = array<i64: 8, 1>}, {transform_indices = @transform_5, window_bounds = array<i64: 8, 128>}]} {
    %c0 = arith.constant 0 : index
    %c0_0 = arith.constant 0 : index
    %0 = vector.load %arg1[%c0, %c0_0] : memref<128x512xf32, #tpu.memory_space<vmem>>, vector<128x512xf32>
    %1 = arith.truncf %0 : vector<128x512xf32> to vector<128x512xbf16>
    %c0_1 = arith.constant 0 : index
    %c0_2 = arith.constant 0 : index
    %2 = vector.load %arg2[%c0_1, %c0_2] : memref<512x128xbf16, #tpu.memory_space<vmem>>, vector<512x128xbf16>
    %cst = arith.constant dense<0.000000e+00> : vector<128x128xf32>
    %3 = tpu.matmul %1, %2, %cst {dimension_numbers = #tpu.dot_dimension_numbers<[1], [0], [0], [1], [0, 0, 1, 1], [], []>} : vector<128x512xbf16>, vector<512x128xbf16>, vector<128x128xf32> -> vector<128x128xf32>
    %c0_3 = arith.constant 0 : index
    %c0_4 = arith.constant 0 : index
    %4 = vector.load %arg3[%c0_3, %c0_4] : memref<1x128xf32, #tpu.memory_space<vmem>>, vector<1x128xf32>
    %5 = vector.broadcast %4 : vector<1x128xf32> to vector<128x128xf32>
    %6 = arith.addf %3, %5 : vector<128x128xf32>
    %cst_5 = arith.constant 0.000000e+00 : f32
    %7 = vector.broadcast %cst_5 : f32 to vector<128x128xf32>
    %8 = arith.maximumf %6, %7 : vector<128x128xf32>
    %9 = tpu.transpose %8, [1, 0] : vector<128x128xf32> -> vector<128x128xf32>
    %c0_6 = arith.constant 0 : index
    %c0_7 = arith.constant 0 : index
    %10 = vector.load %arg4[%c0_6, %c0_7] : memref<8x8xf32, #tpu.memory_space<vmem>>, vector<8x8xf32>
    %c0_8 = arith.constant 0 : index
    %c0_9 = arith.constant 0 : index
    %11 = vector.load %arg5[%c0_8, %c0_9] : memref<8x1xf32, #tpu.memory_space<vmem>>, vector<8x1xf32>
    %12 = vector.extract_strided_slice %9 {offsets = [0, 0], sizes = [16, 128], strides = [1, 1]} : vector<128x128xf32> to vector<16x128xf32>
    %cst_10 = arith.constant dense<0xFF800000> : vector<128xf32>
    %13 = vector.multi_reduction <maximumf>, %12, %cst_10 [0] : vector<16x128xf32> to vector<128xf32>
    %14 = vector.shape_cast %13 : vector<128xf32> to vector<1x128xf32>
    %15 = vector.extract_strided_slice %10 {offsets = [0, 0], sizes = [8, 1], strides = [1, 1]} : vector<8x8xf32> to vector<8x1xf32>
    %16 = vector.broadcast %14 : vector<1x128xf32> to vector<8x128xf32>
    %17 = vector.broadcast %15 : vector<8x1xf32> to vector<8x128xf32>
    %18 = arith.mulf %16, %17 : vector<8x128xf32>
    %19 = vector.broadcast %11 : vector<8x1xf32> to vector<8x128xf32>
    %20 = arith.addf %19, %18 : vector<8x128xf32>
    %21 = vector.extract_strided_slice %9 {offsets = [16, 0], sizes = [16, 128], strides = [1, 1]} : vector<128x128xf32> to vector<16x128xf32>
    %cst_11 = arith.constant dense<0xFF800000> : vector<128xf32>
    %22 = vector.multi_reduction <maximumf>, %21, %cst_11 [0] : vector<16x128xf32> to vector<128xf32>
    %23 = vector.shape_cast %22 : vector<128xf32> to vector<1x128xf32>
    %24 = vector.extract_strided_slice %10 {offsets = [0, 1], sizes = [8, 1], strides = [1, 1]} : vector<8x8xf32> to vector<8x1xf32>
    %25 = vector.broadcast %23 : vector<1x128xf32> to vector<8x128xf32>
    %26 = vector.broadcast %24 : vector<8x1xf32> to vector<8x128xf32>
    %27 = arith.mulf %25, %26 : vector<8x128xf32>
    %28 = arith.addf %20, %27 : vector<8x128xf32>
    %29 = vector.extract_strided_slice %9 {offsets = [32, 0], sizes = [16, 128], strides = [1, 1]} : vector<128x128xf32> to vector<16x128xf32>
    %cst_12 = arith.constant dense<0xFF800000> : vector<128xf32>
    %30 = vector.multi_reduction <maximumf>, %29, %cst_12 [0] : vector<16x128xf32> to vector<128xf32>
    %31 = vector.shape_cast %30 : vector<128xf32> to vector<1x128xf32>
    %32 = vector.extract_strided_slice %10 {offsets = [0, 2], sizes = [8, 1], strides = [1, 1]} : vector<8x8xf32> to vector<8x1xf32>
    %33 = vector.broadcast %31 : vector<1x128xf32> to vector<8x128xf32>
    %34 = vector.broadcast %32 : vector<8x1xf32> to vector<8x128xf32>
    %35 = arith.mulf %33, %34 : vector<8x128xf32>
    %36 = arith.addf %28, %35 : vector<8x128xf32>
    %37 = vector.extract_strided_slice %9 {offsets = [48, 0], sizes = [16, 128], strides = [1, 1]} : vector<128x128xf32> to vector<16x128xf32>
    %cst_13 = arith.constant dense<0xFF800000> : vector<128xf32>
    %38 = vector.multi_reduction <maximumf>, %37, %cst_13 [0] : vector<16x128xf32> to vector<128xf32>
    %39 = vector.shape_cast %38 : vector<128xf32> to vector<1x128xf32>
    %40 = vector.extract_strided_slice %10 {offsets = [0, 3], sizes = [8, 1], strides = [1, 1]} : vector<8x8xf32> to vector<8x1xf32>
    %41 = vector.broadcast %39 : vector<1x128xf32> to vector<8x128xf32>
    %42 = vector.broadcast %40 : vector<8x1xf32> to vector<8x128xf32>
    %43 = arith.mulf %41, %42 : vector<8x128xf32>
    %44 = arith.addf %36, %43 : vector<8x128xf32>
    %45 = vector.extract_strided_slice %9 {offsets = [64, 0], sizes = [16, 128], strides = [1, 1]} : vector<128x128xf32> to vector<16x128xf32>
    %cst_14 = arith.constant dense<0xFF800000> : vector<128xf32>
    %46 = vector.multi_reduction <maximumf>, %45, %cst_14 [0] : vector<16x128xf32> to vector<128xf32>
    %47 = vector.shape_cast %46 : vector<128xf32> to vector<1x128xf32>
    %48 = vector.extract_strided_slice %10 {offsets = [0, 4], sizes = [8, 1], strides = [1, 1]} : vector<8x8xf32> to vector<8x1xf32>
    %49 = vector.broadcast %47 : vector<1x128xf32> to vector<8x128xf32>
    %50 = vector.broadcast %48 : vector<8x1xf32> to vector<8x128xf32>
    %51 = arith.mulf %49, %50 : vector<8x128xf32>
    %52 = arith.addf %44, %51 : vector<8x128xf32>
    %53 = vector.extract_strided_slice %9 {offsets = [80, 0], sizes = [16, 128], strides = [1, 1]} : vector<128x128xf32> to vector<16x128xf32>
    %cst_15 = arith.constant dense<0xFF800000> : vector<128xf32>
    %54 = vector.multi_reduction <maximumf>, %53, %cst_15 [0] : vector<16x128xf32> to vector<128xf32>
    %55 = vector.shape_cast %54 : vector<128xf32> to vector<1x128xf32>
    %56 = vector.extract_strided_slice %10 {offsets = [0, 5], sizes = [8, 1], strides = [1, 1]} : vector<8x8xf32> to vector<8x1xf32>
    %57 = vector.broadcast %55 : vector<1x128xf32> to vector<8x128xf32>
    %58 = vector.broadcast %56 : vector<8x1xf32> to vector<8x128xf32>
    %59 = arith.mulf %57, %58 : vector<8x128xf32>
    %60 = arith.addf %52, %59 : vector<8x128xf32>
    %61 = vector.extract_strided_slice %9 {offsets = [96, 0], sizes = [16, 128], strides = [1, 1]} : vector<128x128xf32> to vector<16x128xf32>
    %cst_16 = arith.constant dense<0xFF800000> : vector<128xf32>
    %62 = vector.multi_reduction <maximumf>, %61, %cst_16 [0] : vector<16x128xf32> to vector<128xf32>
    %63 = vector.shape_cast %62 : vector<128xf32> to vector<1x128xf32>
    %64 = vector.extract_strided_slice %10 {offsets = [0, 6], sizes = [8, 1], strides = [1, 1]} : vector<8x8xf32> to vector<8x1xf32>
    %65 = vector.broadcast %63 : vector<1x128xf32> to vector<8x128xf32>
    %66 = vector.broadcast %64 : vector<8x1xf32> to vector<8x128xf32>
    %67 = arith.mulf %65, %66 : vector<8x128xf32>
    %68 = arith.addf %60, %67 : vector<8x128xf32>
    %69 = vector.extract_strided_slice %9 {offsets = [112, 0], sizes = [16, 128], strides = [1, 1]} : vector<128x128xf32> to vector<16x128xf32>
    %cst_17 = arith.constant dense<0xFF800000> : vector<128xf32>
    %70 = vector.multi_reduction <maximumf>, %69, %cst_17 [0] : vector<16x128xf32> to vector<128xf32>
    %71 = vector.shape_cast %70 : vector<128xf32> to vector<1x128xf32>
    %72 = vector.extract_strided_slice %10 {offsets = [0, 7], sizes = [8, 1], strides = [1, 1]} : vector<8x8xf32> to vector<8x1xf32>
    %73 = vector.broadcast %71 : vector<1x128xf32> to vector<8x128xf32>
    %74 = vector.broadcast %72 : vector<8x1xf32> to vector<8x128xf32>
    %75 = arith.mulf %73, %74 : vector<8x128xf32>
    %76 = arith.addf %68, %75 : vector<8x128xf32>
    %cst_18 = arith.constant dense<0xFF800000> : vector<128xf32>
    %77 = vector.multi_reduction <maximumf>, %76, %cst_18 [0] : vector<8x128xf32> to vector<128xf32>
    %78 = vector.shape_cast %77 : vector<128xf32> to vector<1x128xf32>
    %79 = vector.broadcast %78 : vector<1x128xf32> to vector<8x128xf32>
    %80 = arith.subf %76, %79 : vector<8x128xf32>
    %81 = math.exp %80 : vector<8x128xf32>
    %cst_19 = arith.constant dense<0.000000e+00> : vector<128xf32>
    %82 = vector.multi_reduction <add>, %81, %cst_19 [0] : vector<8x128xf32> to vector<128xf32>
    %83 = vector.shape_cast %82 : vector<128xf32> to vector<1x128xf32>
    %84 = math.log %83 : vector<1x128xf32>
    %85 = vector.broadcast %84 : vector<1x128xf32> to vector<8x128xf32>
    %86 = arith.subf %80, %85 : vector<8x128xf32>
    %c0_20 = arith.constant 0 : index
    %c0_21 = arith.constant 0 : index
    %87 = vector.load %arg6[%c0_20, %c0_21] : memref<8x128xf32, #tpu.memory_space<vmem>>, vector<8x128xf32>
    tpu.vector_store %arg6[%c0_20, %c0_21], %86 {strides = array<i32>} : memref<8x128xf32, #tpu.memory_space<vmem>>, vector<8x128xf32>,
    return
  }
  func.func @transform_0(%arg0: i32) -> (i32, i32) {
    %c0_i32 = arith.constant 0 : i32
    %c0_i32_0 = arith.constant 0 : i32
    return %arg0, %c0_i32 : i32, i32
  }
  func.func @transform_1(%arg0: i32) -> (i32, i32) {
    %c0_i32 = arith.constant 0 : i32
    %c0_i32_0 = arith.constant 0 : i32
    %c0_i32_1 = arith.constant 0 : i32
    return %c0_i32, %c0_i32_0 : i32, i32
  }
  func.func @transform_2(%arg0: i32) -> (i32, i32) {
    %c0_i32 = arith.constant 0 : i32
    %c0_i32_0 = arith.constant 0 : i32
    %c0_i32_1 = arith.constant 0 : i32
    return %c0_i32, %c0_i32_0 : i32, i32
  }
  func.func @transform_3(%arg0: i32) -> (i32, i32) {
    %c0_i32 = arith.constant 0 : i32
    %c0_i32_0 = arith.constant 0 : i32
    %c0_i32_1 = arith.constant 0 : i32
    return %c0_i32, %c0_i32_0 : i32, i32
  }
  func.func @transform_4(%arg0: i32) -> (i32, i32) {
    %c0_i32 = arith.constant 0 : i32
    %c0_i32_0 = arith.constant 0 : i32
    %c0_i32_1 = arith.constant 0 : i32
    return %c0_i32, %c0_i32_0 : i32, i32
  }
  func.func @transform_5(%arg0: i32) -> (i32, i32) {
    %c0_i32 = arith.constant 0 : i32
    %c0_i32_0 = arith.constant 0 : i32
    return %c0_i32, %arg0 : i32, i32
  }
}

</mosaic_0001>

<llo_original>
// kernel: tpu_custom_call.1
$region0: #{tpu_custom_call.1}
  #allocation0 [shape = 'u32[]', space=smem, size = 0x4, offset = 0x4, fixed_abs, tag = 'smem constant byte address 0x4 - core index']
  #allocation1 [shape = 'u32[144,128]{1,0:T(1,128)}', space=vmem, size = 0x12000, scoped, tag = 'internal scratch']
  %s0 = inlined_call_operand.hbm [shape: f32[128,512], index: 0, kind: input, shape index: {}]
  %s1 = inlined_call_operand.hbm [shape: bf16[512,128], index: 1, kind: input, shape index: {}]
  %s2 = inlined_call_operand.vmem [shape: f32[1,128], index: 2, kind: input, shape index: {}]
  %s3 = inlined_call_operand.vmem [shape: f32[8,8], index: 3, kind: input, shape index: {}]
  %s4 = inlined_call_operand.vmem [shape: f32[8,1], index: 4, kind: input, shape index: {}]
  %s5 = inlined_call_operand.hbm [shape: f32[8,128], index: 5, kind: output, shape index: {}]
  %s6 = sld [smem:[#allocation0]]
  $region38: #{tpu_custom_call.1} parent=0
    _
  %s8 = ssub.s32 1, %s6
  %s9 = scalar_select 0, %s8, %s6
  $region1: #{tpu_custom_call.1} parent=0
    #allocation2 [shape = 'u8[262144]{0}', space=vmem, size = 0x40000, scoped, tag = 'input window, operand 0, single buffered']
    #allocation3 [shape = 's32[1]{0}', space=sflag, size = 0x4, scoped, tag = 'scoped memory for tpu_custom_call.1']
    #allocation4 [shape = 's32[1]{0}', space=sflag, size = 0x4, scoped, tag = 'scoped memory for tpu_custom_call.1']
    #allocation5 [shape = 'u8[131072]{0}', space=vmem, size = 0x20000, scoped, tag = 'input window, operand 1, single buffered']
    #allocation6 [shape = 's32[1]{0}', space=sflag, size = 0x4, scoped, tag = 'scoped memory for tpu_custom_call.1']
    #allocation7 [shape = 'u8[4096]{0}', space=vmem, size = 0x1000, scoped, tag = 'output window, operand 0, single buffered']
    %10 = vsyncpa [#allocation3], 0
    %11 = vsyncpa [#allocation6], 0
    %12 = vsyncpa [#allocation4], 0
    // Predicated region
    $region2: #{tpu_custom_call.1} parent=1 // pred_check
      _
    $region3: #{tpu_custom_call.1} parent=1 // pred_check_branch
      %14 = sbr.rel (0) target = $region5
    $region4: #{tpu_custom_call.1} parent=1 // pred_region
      %s16 = ssub.s32 8192, 8192
      %17 = vsyncadd [#allocation3], %s16
      %s18 = sshll.u32 [#allocation2], 4
      %s19 = int_to_ptr.vmem [resolvable:$true] %s18
      %24 = dma.hbm_to_vmem [thread:$0]  %s0, 8192, %s19, [#allocation3], 512, 512, 32
    $region5: #{tpu_custom_call.1} parent=1 // pred_fallthru
      _
    // Predicated region
    $region6: #{tpu_custom_call.1} parent=1 // pred_check
      _
    $region7: #{tpu_custom_call.1} parent=1 // pred_check_branch
      %26 = sbr.rel (0) target = $region9
    $region8: #{tpu_custom_call.1} parent=1 // pred_region
      %s28 = ssub.s32 4096, 4096
      %29 = vsyncadd [#allocation6], %s28
      %s30 = sshll.u32 [#allocation5], 4
      %s31 = int_to_ptr.vmem [resolvable:$true] %s30
      %36 = dma.hbm_to_vmem [thread:$0]  %s1, 4096, %s31, [#allocation6], 64, 64, 4
    $region9: #{tpu_custom_call.1} parent=1 // pred_fallthru
      _
    // Predicated region
    $region10: #{tpu_custom_call.1} parent=1 // pred_check
      _
    $region11: #{tpu_custom_call.1} parent=1 // pred_check_branch
      %38 = sbr.rel (0) target = $region13
    $region12: #{tpu_custom_call.1} parent=1 // pred_region
      _
    $region13: #{tpu_custom_call.1} parent=1 // pred_fallthru
      _
    // Predicated region
    $region14: #{tpu_custom_call.1} parent=1 // pred_check
      _
    $region15: #{tpu_custom_call.1} parent=1 // pred_check_branch
      %40 = sbr.rel (0) target = $region17
    $region16: #{tpu_custom_call.1} parent=1 // pred_region
      _
    $region17: #{tpu_custom_call.1} parent=1 // pred_fallthru
      _
    // Predicated region
    $region18: #{tpu_custom_call.1} parent=1 // pred_check
      _
    $region19: #{tpu_custom_call.1} parent=1 // pred_check_branch
      %42 = sbr.rel (0) target = $region21
    $region20: #{tpu_custom_call.1} parent=1 // pred_region
      _
    $region21: #{tpu_custom_call.1} parent=1 // pred_fallthru
      _
    // Predicated region
    $region22: #{tpu_custom_call.1} parent=1 // pred_check
      _
    $region23: #{tpu_custom_call.1} parent=1 // pred_check_branch
      %44 = sbr.rel (0) target = $region25
    $region24: #{tpu_custom_call.1} parent=1 // pred_region
      %45 = dma.done [#allocation3], 8192
    $region25: #{tpu_custom_call.1} parent=1 // pred_fallthru
      _
    // Predicated region
    $region26: #{tpu_custom_call.1} parent=1 // pred_check
      _
    $region27: #{tpu_custom_call.1} parent=1 // pred_check_branch
      %47 = sbr.rel (0) target = $region29
    $region28: #{tpu_custom_call.1} parent=1 // pred_region
      %48 = dma.done [#allocation6], 4096
    $region29: #{tpu_custom_call.1} parent=1 // pred_fallthru
      _
    %v50 = vld [vmem:[#allocation2] sm:$0xff]
    %v51 = vld [vmem:[#allocation2 + $0x8] sm:$0xff]
    %v52 = vld [vmem:[#allocation2 + $0x10] sm:$0xff]
    %v53 = vld [vmem:[#allocation2 + $0x18] sm:$0xff]
    %v54 = vld [vmem:[#allocation2 + $0x20] sm:$0xff]
    %v55 = vld [vmem:[#allocation2 + $0x28] sm:$0xff]
    %v56 = vld [vmem:[#allocation2 + $0x30] sm:$0xff]
    %v57 = vld [vmem:[#allocation2 + $0x38] sm:$0xff]
    %v58 = vld [vmem:[#allocation2 + $0x40] sm:$0xff]
    %v59 = vld [vmem:[#allocation2 + $0x48] sm:$0xff]
    %v60 = vld [vmem:[#allocation2 + $0x50] sm:$0xff]
    %v61 = vld [vmem:[#allocation2 + $0x58] sm:$0xff]
    %v62 = vld [vmem:[#allocation2 + $0x60] sm:$0xff]
    %v63 = vld [vmem:[#allocation2 + $0x68] sm:$0xff]
    %v64 = vld [vmem:[#allocation2 + $0x70] sm:$0xff]
    %v65 = vld [vmem:[#allocation2 + $0x78] sm:$0xff]
    %v66 = vld [vmem:[#allocation2 + $0x80] sm:$0xff]
    %v67 = vld [vmem:[#allocation2 + $0x88] sm:$0xff]
    %v68 = vld [vmem:[#allocation2 + $0x90] sm:$0xff]
    %v69 = vld [vmem:[#allocation2 + $0x98] sm:$0xff]
    %v70 = vld [vmem:[#allocation2 + $0xa0] sm:$0xff]
    %v71 = vld [vmem:[#allocation2 + $0xa8] sm:$0xff]
    %v72 = vld [vmem:[#allocation2 + $0xb0] sm:$0xff]
    %v73 = vld [vmem:[#allocation2 + $0xb8] sm:$0xff]
    %v74 = vld [vmem:[#allocation2 + $0xc0] sm:$0xff]
    %v75 = vld [vmem:[#allocation2 + $0xc8] sm:$0xff]
    %v76 = vld [vmem:[#allocation2 + $0xd0] sm:$0xff]
    %v77 = vld [vmem:[#allocation2 + $0xd8] sm:$0xff]
    %v78 = vld [vmem:[#allocation2 + $0xe0] sm:$0xff]
    %v79 = vld [vmem:[#allocation2 + $0xe8] sm:$0xff]
    %v80 = vld [vmem:[#allocation2 + $0xf0] sm:$0xff]
    %v81 = vld [vmem:[#allocation2 + $0xf8] sm:$0xff]
    %v82 = vld [vmem:[#allocation2 + $0x100] sm:$0xff]
    %v83 = vld [vmem:[#allocation2 + $0x108] sm:$0xff]
    %v84 = vld [vmem:[#allocation2 + $0x110] sm:$0xff]
    %v85 = vld [vmem:[#allocation2 + $0x118] sm:$0xff]
    %v86 = vld [vmem:[#allocation2 + $0x120] sm:$0xff]
    %v87 = vld [vmem:[#allocation2 + $0x128] sm:$0xff]
    %v88 = vld [vmem:[#allocation2 + $0x130] sm:$0xff]
    %v89 = vld [vmem:[#allocation2 + $0x138] sm:$0xff]
    %v90 = vld [vmem:[#allocation2 + $0x140] sm:$0xff]
    %v91 = vld [vmem:[#allocation2 + $0x148] sm:$0xff]
    %v92 = vld [vmem:[#allocation2 + $0x150] sm:$0xff]
    %v93 = vld [vmem:[#allocation2 + $0x158] sm:$0xff]
    %v94 = vld [vmem:[#allocation2 + $0x160] sm:$0xff]
    %v95 = vld [vmem:[#allocation2 + $0x168] sm:$0xff]
    %v96 = vld [vmem:[#allocation2 + $0x170] sm:$0xff]
    %v97 = vld [vmem:[#allocation2 + $0x178] sm:$0xff]
    %v98 = vld [vmem:[#allocation2 + $0x180] sm:$0xff]
    %v99 = vld [vmem:[#allocation2 + $0x188] sm:$0xff]
    %v100 = vld [vmem:[#allocation2 + $0x190] sm:$0xff]
    %v101 = vld [vmem:[#allocation2 + $0x198] sm:$0xff]
    %v102 = vld [vmem:[#allocation2 + $0x1a0] sm:$0xff]
    %v103 = vld [vmem:[#allocation2 + $0x1a8] sm:$0xff]
    %v104 = vld [vmem:[#allocation2 + $0x1b0] sm:$0xff]
    %v105 = vld [vmem:[#allocation2 + $0x1b8] sm:$0xff]
    %v106 = vld [vmem:[#allocation2 + $0x1c0] sm:$0xff]
    %v107 = vld [vmem:[#allocation2 + $0x1c8] sm:$0xff]
    %v108 = vld [vmem:[#allocation2 + $0x1d0] sm:$0xff]
    %v109 = vld [vmem:[#allocation2 + $0x1d8] sm:$0xff]
    %v110 = vld [vmem:[#allocation2 + $0x1e0] sm:$0xff]
    %v111 = vld [vmem:[#allocation2 + $0x1e8] sm:$0xff]
    %v112 = vld [vmem:[#allocation2 + $0x1f0] sm:$0xff]
    %v113 = vld [vmem:[#allocation2 + $0x1f8] sm:$0xff]
    %v114 = vpack.c.bf16 %v54, %v50
    %v115 = vpack.c.bf16 %v55, %v51
    %v116 = vpack.c.bf16 %v56, %v52
    %v117 = vpack.c.bf16 %v57, %v53
    %v118 = vpack.c.bf16 %v62, %v58
    %v119 = vpack.c.bf16 %v63, %v59
    %v120 = vpack.c.bf16 %v64, %v60
    %v121 = vpack.c.bf16 %v65, %v61
    %v122 = vpack.c.bf16 %v70, %v66
    %v123 = vpack.c.bf16 %v71, %v67
    %v124 = vpack.c.bf16 %v72, %v68
    %v125 = vpack.c.bf16 %v73, %v69
    %v126 = vpack.c.bf16 %v78, %v74
    %v127 = vpack.c.bf16 %v79, %v75
    %v128 = vpack.c.bf16 %v80, %v76
    %v129 = vpack.c.bf16 %v81, %v77
    %v130 = vpack.c.bf16 %v86, %v82
    %v131 = vpack.c.bf16 %v87, %v83
    %v132 = vpack.c.bf16 %v88, %v84
    %v133 = vpack.c.bf16 %v89, %v85
    %v134 = vpack.c.bf16 %v94, %v90
    %v135 = vpack.c.bf16 %v95, %v91
    %v136 = vpack.c.bf16 %v96, %v92
    %v137 = vpack.c.bf16 %v97, %v93
    %v138 = vpack.c.bf16 %v102, %v98
    %v139 = vpack.c.bf16 %v103, %v99
    %v140 = vpack.c.bf16 %v104, %v100
    %v141 = vpack.c.bf16 %v105, %v101
    %v142 = vpack.c.bf16 %v110, %v106
    %v143 = vpack.c.bf16 %v111, %v107
    %v144 = vpack.c.bf16 %v112, %v108
    %v145 = vpack.c.bf16 %v113, %v109
    %v146 = vld [vmem:[#allocation5] sm:$0xf]
    %v147 = vld [vmem:[#allocation5 + $0x4] sm:$0xf]
    %v148 = vld [vmem:[#allocation5 + $0x8] sm:$0xf]
    %v149 = vld [vmem:[#allocation5 + $0xc] sm:$0xf]
    %v150 = vld [vmem:[#allocation5 + $0x10] sm:$0xf]
    %v151 = vld [vmem:[#allocation5 + $0x14] sm:$0xf]
    %v152 = vld [vmem:[#allocation5 + $0x18] sm:$0xf]
    %v153 = vld [vmem:[#allocation5 + $0x1c] sm:$0xf]
    %v154 = vld [vmem:[#allocation5 + $0x20] sm:$0xf]
    %v155 = vld [vmem:[#allocation5 + $0x24] sm:$0xf]
    %v156 = vld [vmem:[#allocation5 + $0x28] sm:$0xf]
    %v157 = vld [vmem:[#allocation5 + $0x2c] sm:$0xf]
    %v158 = vld [vmem:[#allocation5 + $0x30] sm:$0xf]
    %v159 = vld [vmem:[#allocation5 + $0x34] sm:$0xf]
    %v160 = vld [vmem:[#allocation5 + $0x38] sm:$0xf]
    %v161 = vld [vmem:[#allocation5 + $0x3c] sm:$0xf]
    %v162 = vld [vmem:[#allocation5 + $0x40] sm:$0xf]
    %v163 = vld [vmem:[#allocation5 + $0x44] sm:$0xf]
    %v164 = vld [vmem:[#allocation5 + $0x48] sm:$0xf]
    %v165 = vld [vmem:[#allocation5 + $0x4c] sm:$0xf]
    %v166 = vld [vmem:[#allocation5 + $0x50] sm:$0xf]
    %v167 = vld [vmem:[#allocation5 + $0x54] sm:$0xf]
    %v168 = vld [vmem:[#allocation5 + $0x58] sm:$0xf]
    %v169 = vld [vmem:[#allocation5 + $0x5c] sm:$0xf]
    %v170 = vld [vmem:[#allocation5 + $0x60] sm:$0xf]
    %v171 = vld [vmem:[#allocation5 + $0x64] sm:$0xf]
    %v172 = vld [vmem:[#allocation5 + $0x68] sm:$0xf]
    %v173 = vld [vmem:[#allocation5 + $0x6c] sm:$0xf]
    %v174 = vld [vmem:[#allocation5 + $0x70] sm:$0xf]
    %v175 = vld [vmem:[#allocation5 + $0x74] sm:$0xf]
    %v176 = vld [vmem:[#allocation5 + $0x78] sm:$0xf]
    %v177 = vld [vmem:[#allocation5 + $0x7c] sm:$0xf]
    %v178 = vld [vmem:[#allocation5 + $0x80] sm:$0xf]
    %v179 = vld [vmem:[#allocation5 + $0x84] sm:$0xf]
    %v180 = vld [vmem:[#allocation5 + $0x88] sm:$0xf]
    %v181 = vld [vmem:[#allocation5 + $0x8c] sm:$0xf]
    %v182 = vld [vmem:[#allocation5 + $0x90] sm:$0xf]
    %v183 = vld [vmem:[#allocation5 + $0x94] sm:$0xf]
    %v184 = vld [vmem:[#allocation5 + $0x98] sm:$0xf]
    %v185 = vld [vmem:[#allocation5 + $0x9c] sm:$0xf]
    %v186 = vld [vmem:[#allocation5 + $0xa0] sm:$0xf]
    %v187 = vld [vmem:[#allocation5 + $0xa4] sm:$0xf]
    %v188 = vld [vmem:[#allocation5 + $0xa8] sm:$0xf]
    %v189 = vld [vmem:[#allocation5 + $0xac] sm:$0xf]
    %v190 = vld [vmem:[#allocation5 + $0xb0] sm:$0xf]
    %v191 = vld [vmem:[#allocation5 + $0xb4] sm:$0xf]
    %v192 = vld [vmem:[#allocation5 + $0xb8] sm:$0xf]
    %v193 = vld [vmem:[#allocation5 + $0xbc] sm:$0xf]
    %v194 = vld [vmem:[#allocation5 + $0xc0] sm:$0xf]
    %v195 = vld [vmem:[#allocation5 + $0xc4] sm:$0xf]
    %v196 = vld [vmem:[#allocation5 + $0xc8] sm:$0xf]
    %v197 = vld [vmem:[#allocation5 + $0xcc] sm:$0xf]
    %v198 = vld [vmem:[#allocation5 + $0xd0] sm:$0xf]
    %v199 = vld [vmem:[#allocation5 + $0xd4] sm:$0xf]
    %v200 = vld [vmem:[#allocation5 + $0xd8] sm:$0xf]
    %v201 = vld [vmem:[#allocation5 + $0xdc] sm:$0xf]
    %v202 = vld [vmem:[#allocation5 + $0xe0] sm:$0xf]
    %v203 = vld [vmem:[#allocation5 + $0xe4] sm:$0xf]
    %v204 = vld [vmem:[#allocation5 + $0xe8] sm:$0xf]
    %v205 = vld [vmem:[#allocation5 + $0xec] sm:$0xf]
    %v206 = vld [vmem:[#allocation5 + $0xf0] sm:$0xf]
    %v207 = vld [vmem:[#allocation5 + $0xf4] sm:$0xf]
    %v208 = vld [vmem:[#allocation5 + $0xf8] sm:$0xf]
    %v209 = vld [vmem:[#allocation5 + $0xfc] sm:$0xf]
    %v210 = vld [vmem:[%s2] sm:$0x1]
    %v212 = vlaneseq
    %v213 = vshrl.u32 %v212, 7
    %v214 = vsub.s32 0, %v213
    %v215 = vrot.slane %v210, %v214
    %v281 = vunpack.c.l.b16 %v146
    %v282 = vunpack.c.l.b16 %v147
    %v283 = vunpack.c.l.b16 %v148
    %v284 = vunpack.c.l.b16 %v149
    %v285 = vunpack.c.l.b16 %v150
    %v286 = vunpack.c.l.b16 %v151
    %v287 = vunpack.c.l.b16 %v152
    %v288 = vunpack.c.l.b16 %v153
    %v289 = vunpack.c.l.b16 %v154
    %v290 = vunpack.c.l.b16 %v155
    %v291 = vunpack.c.l.b16 %v156
    %v292 = vunpack.c.l.b16 %v157
    %v293 = vunpack.c.l.b16 %v158
    %v294 = vunpack.c.l.b16 %v159
    %v295 = vunpack.c.l.b16 %v160
    %v296 = vunpack.c.l.b16 %v161
    %v297 = vunpack.c.l.b16 %v162
    %v298 = vunpack.c.l.b16 %v163
    %v299 = vunpack.c.l.b16 %v164
    %v300 = vunpack.c.l.b16 %v165
    %v301 = vunpack.c.l.b16 %v166
    %v302 = vunpack.c.l.b16 %v167
    %v303 = vunpack.c.l.b16 %v168
    %v304 = vunpack.c.l.b16 %v169
    %v305 = vunpack.c.l.b16 %v170
    %v306 = vunpack.c.l.b16 %v171
    %v307 = vunpack.c.l.b16 %v172
    %v308 = vunpack.c.l.b16 %v173
    %v309 = vunpack.c.l.b16 %v174
    %v310 = vunpack.c.l.b16 %v175
    %v311 = vunpack.c.l.b16 %v176
    %v312 = vunpack.c.l.b16 %v177
    %v313 = vunpack.c.l.b16 %v178
    %v314 = vunpack.c.l.b16 %v179
    %v315 = vunpack.c.l.b16 %v180
    %v316 = vunpack.c.l.b16 %v181
    %v317 = vunpack.c.l.b16 %v182
    %v318 = vunpack.c.l.b16 %v183
    %v319 = vunpack.c.l.b16 %v184
    %v320 = vunpack.c.l.b16 %v185
    %v321 = vunpack.c.l.b16 %v186
    %v322 = vunpack.c.l.b16 %v187
    %v323 = vunpack.c.l.b16 %v188
    %v324 = vunpack.c.l.b16 %v189
    %v325 = vunpack.c.l.b16 %v190
    %v326 = vunpack.c.l.b16 %v191
    %v327 = vunpack.c.l.b16 %v192
    %v328 = vunpack.c.l.b16 %v193
    %v329 = vunpack.c.l.b16 %v194
    %v330 = vunpack.c.l.b16 %v195
    %v331 = vunpack.c.l.b16 %v196
    %v332 = vunpack.c.l.b16 %v197
    %v333 = vunpack.c.l.b16 %v198
    %v334 = vunpack.c.l.b16 %v199
    %v335 = vunpack.c.l.b16 %v200
    %v336 = vunpack.c.l.b16 %v201
    %v337 = vunpack.c.l.b16 %v202
    %v338 = vunpack.c.l.b16 %v203
    %v339 = vunpack.c.l.b16 %v204
    %v340 = vunpack.c.l.b16 %v205
    %v341 = vunpack.c.l.b16 %v206
    %v342 = vunpack.c.l.b16 %v207
    %v343 = vunpack.c.l.b16 %v208
    %v344 = vunpack.c.l.b16 %v209
    %v345 = vpack.c.b16 %v282, %v281
    %v346 = vpack.c.b16 %v284, %v283
    %v347 = vpack.c.b16 %v286, %v285
    %v348 = vpack.c.b16 %v288, %v287
    %v349 = vpack.c.b16 %v290, %v289
    %v350 = vpack.c.b16 %v292, %v291
    %v351 = vpack.c.b16 %v294, %v293
    %v352 = vpack.c.b16 %v296, %v295
    %v353 = vpack.c.b16 %v298, %v297
    %v354 = vpack.c.b16 %v300, %v299
    %v355 = vpack.c.b16 %v302, %v301
    %v356 = vpack.c.b16 %v304, %v303
    %v357 = vpack.c.b16 %v306, %v305
    %v358 = vpack.c.b16 %v308, %v307
    %v359 = vpack.c.b16 %v310, %v309
    %v360 = vpack.c.b16 %v312, %v311
    %v361 = vpack.c.b16 %v314, %v313
    %v362 = vpack.c.b16 %v316, %v315
    %v363 = vpack.c.b16 %v318, %v317
    %v364 = vpack.c.b16 %v320, %v319
    %v365 = vpack.c.b16 %v322, %v321
    %v366 = vpack.c.b16 %v324, %v323
    %v367 = vpack.c.b16 %v326, %v325
    %v368 = vpack.c.b16 %v328, %v327
    %v369 = vpack.c.b16 %v330, %v329
    %v370 = vpack.c.b16 %v332, %v331
    %v371 = vpack.c.b16 %v334, %v333
    %v372 = vpack.c.b16 %v336, %v335
    %v373 = vpack.c.b16 %v338, %v337
    %v374 = vpack.c.b16 %v340, %v339
    %v375 = vpack.c.b16 %v342, %v341
    %v376 = vpack.c.b16 %v344, %v343
    %409 = vmatprep.subr.bf16.mxu0 0
    %410 = vmatpush1.bf16.msra.mxu0 %v345
    %411 = vmatprep.subr.bf16.mxu0 0
    %412 = vmatpush1.bf16.msra.mxu0 %v346
    %413 = vmatprep.subr.bf16.mxu0 0
    %414 = vmatpush1.bf16.msra.mxu0 %v347
    %415 = vmatprep.subr.bf16.mxu0 0
    %416 = vmatpush1.bf16.msra.mxu0 %v348
    %417 = vmatprep.subr.bf16.mxu0 0
    %418 = vmatpush1.bf16.msra.mxu0 %v349
    %419 = vmatprep.subr.bf16.mxu0 0
    %420 = vmatpush1.bf16.msra.mxu0 %v350
    %421 = vmatprep.subr.bf16.mxu0 0
    %422 = vmatpush1.bf16.msra.mxu0 %v351
    %423 = vmatprep.subr.bf16.mxu0 0
    %424 = vmatpush1.bf16.msra.mxu0 %v352
    %425 = vmatprep.subr.bf16.mxu0 0
    %426 = vmatpush1.bf16.msra.mxu0 %v353
    %427 = vmatprep.subr.bf16.mxu0 0
    %428 = vmatpush1.bf16.msra.mxu0 %v354
    %429 = vmatprep.subr.bf16.mxu0 0
    %430 = vmatpush1.bf16.msra.mxu0 %v355
    %431 = vmatprep.subr.bf16.mxu0 0
    %432 = vmatpush1.bf16.msra.mxu0 %v356
    %433 = vmatprep.subr.bf16.mxu0 0
    %434 = vmatpush1.bf16.msra.mxu0 %v357
    %435 = vmatprep.subr.bf16.mxu0 0
    %436 = vmatpush1.bf16.msra.mxu0 %v358
    %437 = vmatprep.subr.bf16.mxu0 0
    %438 = vmatpush1.bf16.msra.mxu0 %v359
    %439 = vmatprep.subr.bf16.mxu0 0
    %440 = vmatpush1.bf16.msra.mxu0 %v360
    %441 = vmatprep.mubr.bf16.mxu0 %v115
    %442 = vmatmul.mubr.bf16.gmra.mrb[0].mxu0 %v114
    %v443 = vpop.f32.mrb[0].mxu0
    %v444 = vadd.f32 %v215, %v443
    %v445 = vpop.f32.mrb[0].mxu0
    %v446 = vpop.f32.mrb[0].mxu0
    %v447 = vadd.f32 %v215, %v446
    %v448 = vpop.f32.mrb[0].mxu0
    %449 = vmatprep.mubr.bf16.mxu0 %v119
    %450 = vmatmul.mubr.bf16.gmra.mrb[0].mxu0 %v118
    %v451 = vpop.f32.mrb[0].mxu0
    %v452 = vadd.f32 %v215, %v451
    %v453 = vpop.f32.mrb[0].mxu0
    %v454 = vpop.f32.mrb[0].mxu0
    %v455 = vadd.f32 %v215, %v454
    %v456 = vpop.f32.mrb[0].mxu0
    %457 = vmatprep.mubr.bf16.mxu0 %v123
    %458 = vmatmul.mubr.bf16.gmra.mrb[0].mxu0 %v122
    %v459 = vpop.f32.mrb[0].mxu0
    %v460 = vadd.f32 %v215, %v459
    %v461 = vpop.f32.mrb[0].mxu0
    %v462 = vpop.f32.mrb[0].mxu0
    %v463 = vadd.f32 %v215, %v462
    %v464 = vpop.f32.mrb[0].mxu0
    %465 = vmatprep.mubr.bf16.mxu0 %v127
    %466 = vmatmul.mubr.bf16.gmra.mrb[0].mxu0 %v126
    %v467 = vpop.f32.mrb[0].mxu0
    %v468 = vadd.f32 %v215, %v467
    %v469 = vpop.f32.mrb[0].mxu0
    %v470 = vpop.f32.mrb[0].mxu0
    %v471 = vadd.f32 %v215, %v470
    %v472 = vpop.f32.mrb[0].mxu0
    %473 = vmatprep.mubr.bf16.mxu0 %v131
    %474 = vmatmul.mubr.bf16.gmra.mrb[0].mxu0 %v130
    %v475 = vpop.f32.mrb[0].mxu0
    %v476 = vadd.f32 %v215, %v475
    %v477 = vpop.f32.mrb[0].mxu0
    %v478 = vpop.f32.mrb[0].mxu0
    %v479 = vadd.f32 %v215, %v478
    %v480 = vpop.f32.mrb[0].mxu0
    %481 = vmatprep.mubr.bf16.mxu0 %v135
    %482 = vmatmul.mubr.bf16.gmra.mrb[0].mxu0 %v134
    %v483 = vpop.f32.mrb[0].mxu0
    %v484 = vadd.f32 %v215, %v483
    %v485 = vpop.f32.mrb[0].mxu0
    %v486 = vpop.f32.mrb[0].mxu0
    %v487 = vadd.f32 %v215, %v486
    %v488 = vpop.f32.mrb[0].mxu0
    %489 = vmatprep.mubr.bf16.mxu0 %v139
    %490 = vmatmul.mubr.bf16.gmra.mrb[0].mxu0 %v138
    %v491 = vpop.f32.mrb[0].mxu0
    %v492 = vadd.f32 %v215, %v491
    %v493 = vpop.f32.mrb[0].mxu0
    %v494 = vpop.f32.mrb[0].mxu0
    %v495 = vadd.f32 %v215, %v494
    %v496 = vpop.f32.mrb[0].mxu0
    %497 = vmatprep.mubr.bf16.mxu0 %v143
    %498 = vmatmul.mubr.bf16.gmra.mrb[0].mxu0 %v142
    %v499 = vpop.f32.mrb[0].mxu0
    %v500 = vadd.f32 %v215, %v499
    %v501 = vpop.f32.mrb[0].mxu0
    %v502 = vpop.f32.mrb[0].mxu0
    %v503 = vadd.f32 %v215, %v502
    %v504 = vpop.f32.mrb[0].mxu0
    %505 = vdwg.mxu0
    %506 = vmatprep.subr.bf16.mxu0 0
    %507 = vmatpush1.bf16.msra.mxu0 %v361
    %508 = vmatprep.subr.bf16.mxu0 0
    %509 = vmatpush1.bf16.msra.mxu0 %v362
    %510 = vmatprep.subr.bf16.mxu0 0
    %511 = vmatpush1.bf16.msra.mxu0 %v363
    %512 = vmatprep.subr.bf16.mxu0 0
    %513 = vmatpush1.bf16.msra.mxu0 %v364
    %514 = vmatprep.subr.bf16.mxu0 0
    %515 = vmatpush1.bf16.msra.mxu0 %v365
    %516 = vmatprep.subr.bf16.mxu0 0
    %517 = vmatpush1.bf16.msra.mxu0 %v366
    %518 = vmatprep.subr.bf16.mxu0 0
    %519 = vmatpush1.bf16.msra.mxu0 %v367
    %520 = vmatprep.subr.bf16.mxu0 0
    %521 = vmatpush1.bf16.msra.mxu0 %v368
    %522 = vmatprep.subr.bf16.mxu0 0
    %523 = vmatpush1.bf16.msra.mxu0 %v369
    %524 = vmatprep.subr.bf16.mxu0 0
    %525 = vmatpush1.bf16.msra.mxu0 %v370
    %526 = vmatprep.subr.bf16.mxu0 0
    %527 = vmatpush1.bf16.msra.mxu0 %v371
    %528 = vmatprep.subr.bf16.mxu0 0
    %529 = vmatpush1.bf16.msra.mxu0 %v372
    %530 = vmatprep.subr.bf16.mxu0 0
    %531 = vmatpush1.bf16.msra.mxu0 %v373
    %532 = vmatprep.subr.bf16.mxu0 0
    %533 = vmatpush1.bf16.msra.mxu0 %v374
    %534 = vmatprep.subr.bf16.mxu0 0
    %535 = vmatpush1.bf16.msra.mxu0 %v375
    %536 = vmatprep.subr.bf16.mxu0 0
    %537 = vmatpush1.bf16.msra.mxu0 %v376
    %538 = vmatprep.mubr.bf16.mxu0 %v117
    %539 = vmatmul.mubr.bf16.gmra.mrb[0].mxu0 %v116
    %v540 = vpop.f32.mrb[0].mxu0
    %v541 = vadd.f32 %v444, %v540
    %v542 = vpop.f32.mrb[0].mxu0
    %v543 = vpop.f32.mrb[0].mxu0
    %v544 = vadd.f32 %v447, %v543
    %v545 = vpop.f32.mrb[0].mxu0
    %546 = vmatprep.mubr.bf16.mxu0 %v121
    %547 = vmatmul.mubr.bf16.gmra.mrb[0].mxu0 %v120
    %v548 = vpop.f32.mrb[0].mxu0
    %v549 = vadd.f32 %v452, %v548
    %v550 = vpop.f32.mrb[0].mxu0
    %v551 = vpop.f32.mrb[0].mxu0
    %v552 = vadd.f32 %v455, %v551
    %v553 = vpop.f32.mrb[0].mxu0
    %554 = vmatprep.mubr.bf16.mxu0 %v125
    %555 = vmatmul.mubr.bf16.gmra.mrb[0].mxu0 %v124
    %v556 = vpop.f32.mrb[0].mxu0
    %v557 = vadd.f32 %v460, %v556
    %v558 = vpop.f32.mrb[0].mxu0
    %v559 = vpop.f32.mrb[0].mxu0
    %v560 = vadd.f32 %v463, %v559
    %v561 = vpop.f32.mrb[0].mxu0
    %562 = vmatprep.mubr.bf16.mxu0 %v129
    %563 = vmatmul.mubr.bf16.gmra.mrb[0].mxu0 %v128
    %v564 = vpop.f32.mrb[0].mxu0
    %v565 = vadd.f32 %v468, %v564
    %v566 = vpop.f32.mrb[0].mxu0
    %v567 = vpop.f32.mrb[0].mxu0
    %v568 = vadd.f32 %v471, %v567
    %v569 = vpop.f32.mrb[0].mxu0
    %570 = vmatprep.mubr.bf16.mxu0 %v133
    %571 = vmatmul.mubr.bf16.gmra.mrb[0].mxu0 %v132
    %v572 = vpop.f32.mrb[0].mxu0
    %v573 = vadd.f32 %v476, %v572
    %v574 = vpop.f32.mrb[0].mxu0
    %v575 = vpop.f32.mrb[0].mxu0
    %v576 = vadd.f32 %v479, %v575
    %v577 = vpop.f32.mrb[0].mxu0
    %578 = vmatprep.mubr.bf16.mxu0 %v137
    %579 = vmatmul.mubr.bf16.gmra.mrb[0].mxu0 %v136
    %v580 = vpop.f32.mrb[0].mxu0
    %v581 = vadd.f32 %v484, %v580
    %v582 = vpop.f32.mrb[0].mxu0
    %v583 = vpop.f32.mrb[0].mxu0
    %v584 = vadd.f32 %v487, %v583
    %v585 = vpop.f32.mrb[0].mxu0
    %586 = vmatprep.mubr.bf16.mxu0 %v141
    %587 = vmatmul.mubr.bf16.gmra.mrb[0].mxu0 %v140
    %v588 = vpop.f32.mrb[0].mxu0
    %v589 = vadd.f32 %v492, %v588
    %v590 = vpop.f32.mrb[0].mxu0
    %v591 = vpop.f32.mrb[0].mxu0
    %v592 = vadd.f32 %v495, %v591
    %v593 = vpop.f32.mrb[0].mxu0
    %594 = vmatprep.mubr.bf16.mxu0 %v145
    %595 = vmatmul.mubr.bf16.gmra.mrb[0].mxu0 %v144
    %v596 = vpop.f32.mrb[0].mxu0
    %v597 = vadd.f32 %v500, %v596
    %v598 = vpop.f32.mrb[0].mxu0
    %v599 = vpop.f32.mrb[0].mxu0
    %v600 = vadd.f32 %v503, %v599
    %v601 = vpop.f32.mrb[0].mxu0
    %602 = vdwg.mxu0
    %v603 = vmax.f32 %v541, 0.0
    %v604 = vmax.f32 %v544, 0.0
    %v605 = vmax.f32 %v549, 0.0
    %v606 = vmax.f32 %v552, 0.0
    %v607 = vmax.f32 %v557, 0.0
    %v608 = vmax.f32 %v560, 0.0
    %v609 = vmax.f32 %v565, 0.0
    %v610 = vmax.f32 %v568, 0.0
    %v611 = vmax.f32 %v573, 0.0
    %v612 = vmax.f32 %v576, 0.0
    %v613 = vmax.f32 %v581, 0.0
    %v614 = vmax.f32 %v584, 0.0
    %v615 = vmax.f32 %v589, 0.0
    %v616 = vmax.f32 %v592, 0.0
    %v617 = vmax.f32 %v597, 0.0
    %v618 = vmax.f32 %v600, 0.0
    %619 = vxpose.xlu0.b32.start [1/16] %v603, 128
    %620 = vxpose.xlu0.b32.cont [2/16] %v604, 128
    %621 = vxpose.xlu0.b32.cont [3/16] %v605, 128
    %622 = vxpose.xlu0.b32.cont [4/16] %v606, 128
    %623 = vxpose.xlu0.b32.cont [5/16] %v607, 128
    %624 = vxpose.xlu0.b32.cont [6/16] %v608, 128
    %625 = vxpose.xlu0.b32.cont [7/16] %v609, 128
    %626 = vxpose.xlu0.b32.cont [8/16] %v610, 128
    %627 = vxpose.xlu0.b32.cont [9/16] %v611, 128
    %628 = vxpose.xlu0.b32.cont [10/16] %v612, 128
    %629 = vxpose.xlu0.b32.cont [11/16] %v613, 128
    %630 = vxpose.xlu0.b32.cont [12/16] %v614, 128
    %631 = vxpose.xlu0.b32.cont [13/16] %v615, 128
    %632 = vxpose.xlu0.b32.cont [14/16] %v616, 128
    %633 = vxpose.xlu0.b32.cont [15/16] %v617, 128
    %634 = vxpose.xlu0.b32.end [16/16] %v618, 128
    %v635 = vpop.trf.xlu0
    %v636 = vpop.trf.xlu0
    %v637 = vpop.trf.xlu0
    %v638 = vpop.trf.xlu0
    %v639 = vpop.trf.xlu0
    %v640 = vpop.trf.xlu0
    %v641 = vpop.trf.xlu0
    %v642 = vpop.trf.xlu0
    %v643 = vpop.trf.xlu0
    %v644 = vpop.trf.xlu0
    %v645 = vpop.trf.xlu0
    %v646 = vpop.trf.xlu0
    %v647 = vpop.trf.xlu0
    %v648 = vpop.trf.xlu0
    %v649 = vpop.trf.xlu0
    %v650 = vpop.trf.xlu0
    %v651 = vld [vmem:[%s3] sm:$0xff]
    %v652 = vld [vmem:[%s4] sm:$0xff]
    %v653 = vmax.f32 %v635, %v636
    %v654 = vrot.slane %v653, 4
    %v655 = vmax.f32 %v653, %v654
    %v656 = vrot.slane %v655, 2
    %v657 = vmax.f32 %v655, %v656
    %v658 = vrot.slane %v657, 1
    %v659 = vmax.f32 %v657, %v658
    %661 = vset.pattern.permute.xlu0 0
    %662 = vperm.xlu0 %661, %v651
    %v663 = vpop.permute.xlu0 %662
    %v665 = vmul.f32 %v659, %v663
    %667 = vset.pattern.permute.xlu0 0
    %668 = vperm.xlu0 %667, %v652
    %v669 = vpop.permute.xlu0 %668
    %v671 = vadd.f32 %v669, %v665
    %v672 = vmax.f32 %v637, %v638
    %v673 = vrot.slane %v672, 4
    %v674 = vmax.f32 %v672, %v673
    %v675 = vrot.slane %v674, 2
    %v676 = vmax.f32 %v674, %v675
    %v677 = vrot.slane %v676, 1
    %v678 = vmax.f32 %v676, %v677
    %679 = vset.pattern.permute.xlu0 1
    %680 = vperm.xlu0 %679, %v651
    %v681 = vpop.permute.xlu0 %680
    %v683 = vmul.f32 %v678, %v681
    %v684 = vadd.f32 %v671, %v683
    %v685 = vmax.f32 %v639, %v640
    %v686 = vrot.slane %v685, 4
    %v687 = vmax.f32 %v685, %v686
    %v688 = vrot.slane %v687, 2
    %v689 = vmax.f32 %v687, %v688
    %v690 = vrot.slane %v689, 1
    %v691 = vmax.f32 %v689, %v690
    %692 = vset.pattern.permute.xlu0 2
    %693 = vperm.xlu0 %692, %v651
    %v694 = vpop.permute.xlu0 %693
    %v696 = vmul.f32 %v691, %v694
    %v697 = vadd.f32 %v684, %v696
    %v698 = vmax.f32 %v641, %v642
    %v699 = vrot.slane %v698, 4
    %v700 = vmax.f32 %v698, %v699
    %v701 = vrot.slane %v700, 2
    %v702 = vmax.f32 %v700, %v701
    %v703 = vrot.slane %v702, 1
    %v704 = vmax.f32 %v702, %v703
    %705 = vset.pattern.permute.xlu0 3
    %706 = vperm.xlu0 %705, %v651
    %v707 = vpop.permute.xlu0 %706
    %v709 = vmul.f32 %v704, %v707
    %v710 = vadd.f32 %v697, %v709
    %v711 = vmax.f32 %v643, %v644
    %v712 = vrot.slane %v711, 4
    %v713 = vmax.f32 %v711, %v712
    %v714 = vrot.slane %v713, 2
    %v715 = vmax.f32 %v713, %v714
    %v716 = vrot.slane %v715, 1
    %v717 = vmax.f32 %v715, %v716
    %718 = vset.pattern.permute.xlu0 4
    %719 = vperm.xlu0 %718, %v651
    %v720 = vpop.permute.xlu0 %719
    %v722 = vmul.f32 %v717, %v720
    %v723 = vadd.f32 %v710, %v722
    %v724 = vmax.f32 %v645, %v646
    %v725 = vrot.slane %v724, 4
    %v726 = vmax.f32 %v724, %v725
    %v727 = vrot.slane %v726, 2
    %v728 = vmax.f32 %v726, %v727
    %v729 = vrot.slane %v728, 1
    %v730 = vmax.f32 %v728, %v729
    %731 = vset.pattern.permute.xlu0 5
    %732 = vperm.xlu0 %731, %v651
    %v733 = vpop.permute.xlu0 %732
    %v735 = vmul.f32 %v730, %v733
    %v736 = vadd.f32 %v723, %v735
    %v737 = vmax.f32 %v647, %v648
    %v738 = vrot.slane %v737, 4
    %v739 = vmax.f32 %v737, %v738
    %v740 = vrot.slane %v739, 2
    %v741 = vmax.f32 %v739, %v740
    %v742 = vrot.slane %v741, 1
    %v743 = vmax.f32 %v741, %v742
    %744 = vset.pattern.permute.xlu0 6
    %745 = vperm.xlu0 %744, %v651
    %v746 = vpop.permute.xlu0 %745
    %v748 = vmul.f32 %v743, %v746
    %v749 = vadd.f32 %v736, %v748
    %v750 = vmax.f32 %v649, %v650
    %v751 = vrot.slane %v750, 4
    %v752 = vmax.f32 %v750, %v751
    %v753 = vrot.slane %v752, 2
    %v754 = vmax.f32 %v752, %v753
    %v755 = vrot.slane %v754, 1
    %v756 = vmax.f32 %v754, %v755
    %757 = vset.pattern.permute.xlu0 7
    %758 = vperm.xlu0 %757, %v651
    %v759 = vpop.permute.xlu0 %758
    %v761 = vmul.f32 %v756, %v759
    %v762 = vadd.f32 %v749, %v761
    %v763 = vrot.slane %v762, 4
    %v764 = vmax.f32 %v762, %v763
    %v765 = vrot.slane %v764, 2
    %v766 = vmax.f32 %v764, %v765
    %v767 = vrot.slane %v766, 1
    %v768 = vmax.f32 %v766, %v767
    %v769 = vsub.f32 %v762, %v768
    %v770 = vmul.f32 %v769, 1.442695
    %v771 = vpow.pop %v770
    %v772 = vrot.slane %v771, 4
    %v773 = vadd.f32 %v771, %v772
    %v774 = vrot.slane %v773, 2
    %v775 = vadd.f32 %v773, %v774
    %v776 = vrot.slane %v775, 1
    %v777 = vadd.f32 %v775, %v776
    %v778 = vlog2.pop %v777
    %v779 = vmul.f32 %v778, 0.6931472
    %v780 = vsub.f32 %v769, %v779
    %781 = vst [vmem:[#allocation7] sm:$0xff] %v780
    // Predicated region
    $region30: #{tpu_custom_call.1} parent=1 // pred_check
      _
    $region31: #{tpu_custom_call.1} parent=1 // pred_check_branch
      %783 = sbr.rel (0) target = $region33
    $region32: #{tpu_custom_call.1} parent=1 // pred_region
      %s785 = ssub.s32 128, 128
      %786 = vsyncadd [#allocation4], %s785
      %s788 = sshll.u32 [#allocation7], 4
      %s789 = int_to_ptr.vmem [resolvable:$true] %s788
      %791 = dma.vmem_to_hbm [thread:$0]  %s789, 128, %s5, [#allocation4]
    $region33: #{tpu_custom_call.1} parent=1 // pred_fallthru
      _
    // Predicated region
    $region34: #{tpu_custom_call.1} parent=1 // pred_check
      _
    $region35: #{tpu_custom_call.1} parent=1 // pred_check_branch
      %793 = sbr.rel (0) target = $region37
    $region36: #{tpu_custom_call.1} parent=1 // pred_region
      %794 = dma.done [#allocation4], 128
    $region37: #{tpu_custom_call.1} parent=1 // pred_fallthru
      _
    %795 = vsyncpa [#allocation3], 1
    %796 = vsyncpa [#allocation6], 1
    %797 = vsyncpa [#allocation4], 1

</llo_original>
